<compile_context>
chip_gen: v7x
topology: tpu7x:2x2x1
jax: 0.10.0
libtpu: 0.0.40
codegen_flags: <defaults>
</compile_context>

<pallas_src>
import jax
import jax.numpy as jnp
from jax.experimental import pallas as pl
from jax.experimental.pallas import tpu as pltpu

H_CHANNELS = 16
S_CHANNELS = 4
R_CHANNELS = 8
NUM_S = 38
NUM_R = 340
IN_FEATURES = NUM_S + 5
NEG_SLOPE = 0.1

MAX_TILE_B = 4096   # batch rows per grid step (well under VMEM on v5e/v6e/v7x)
ROW_ALIGN = 16      # sublane alignment (covers bf16 packing of the x tile)


def _leaky_relu(x):
    return jnp.where(x > 0, x, NEG_SLOPE * x)


def _round_up(x, m):
    return ((x + m - 1) // m) * m


def fc_kernel(x_ref, w1_ref, w2_ref, w4_ref, o_ref):
    # x_ref : (TB, IN_FEATURES)        bf16 streamed batch tile
    # w1_ref: (IN_FEATURES, H)         f32, resident across grid steps
    # w2_ref: (H, H)                   f32, resident
    # w4_ref: (H, NUM_S)               f32, resident
    # o_ref : (TB, NUM_S)              f32 streamed output tile
    x = x_ref[...].astype(jnp.float32)
    h = _leaky_relu(jnp.dot(x, w1_ref[...], preferred_element_type=jnp.float32))
    h = _leaky_relu(jnp.dot(h, w2_ref[...], preferred_element_type=jnp.float32))
    out = jnp.dot(h, w4_ref[...], preferred_element_type=jnp.float32)
    o_ref[...] = out.astype(o_ref.dtype)


def fc_forward(s_x, r_x, params, *, stream_dtype=jnp.bfloat16, tile_b=MAX_TILE_B):
    """Forward pass of FC.

    s_x: (B, NUM_S, S_CHANNELS) or (B, NUM_S * S_CHANNELS)
    r_x: (B, NUM_R, R_CHANNELS) or (B, NUM_R * R_CHANNELS)
    params: PyTorch-layout weights w1 (H, NUM_S+5), w2 (H, H),
            w3 (H, H) [unused in forward], w4 (NUM_S, H).
    """
    B = s_x.shape[0]
    s_x = s_x.reshape(B, NUM_S, S_CHANNELS)
    r_x = r_x.reshape(B, NUM_R, R_CHANNELS)

    # Glue: slice + concat (XLA fuses gather/concat/convert). Stream to the
    # kernel in bf16 to halve HBM read bytes; accumulation stays f32.
    s_feat = s_x[:, :, -1]                                  # (B, NUM_S)
    r_feat = r_x[:, 0, -5:]                                 # (B, 5)
    x = jnp.concatenate([s_feat, r_feat], axis=1).astype(stream_dtype)

    # Pre-transpose weights once; they are tiny and stay resident in VMEM.
    w1_t = params["w1"].T.astype(jnp.float32)               # (IN_FEATURES, H)
    w2_t = params["w2"].T.astype(jnp.float32)               # (H, H)
    w4_t = params["w4"].T.astype(jnp.float32)               # (H, NUM_S)

    # Batch tiling: pad B so every grid step sees a full (TB, ...) tile.
    tb = min(int(tile_b), _round_up(B, ROW_ALIGN))
    tb = _round_up(tb, ROW_ALIGN)
    b_pad = _round_up(B, tb)
    if b_pad != B:
        x = jnp.pad(x, ((0, b_pad - B), (0, 0)))
    grid = (b_pad // tb,)

    out = pl.pallas_call(
        fc_kernel,
        out_shape=jax.ShapeDtypeStruct((b_pad, NUM_S), jnp.float32),
        grid=grid,
        in_specs=[
            pl.BlockSpec((tb, IN_FEATURES), lambda i: (i, 0)),          # streamed
            pl.BlockSpec((IN_FEATURES, H_CHANNELS), lambda i: (0, 0)),  # resident
            pl.BlockSpec((H_CHANNELS, H_CHANNELS), lambda i: (0, 0)),   # resident
            pl.BlockSpec((H_CHANNELS, NUM_S), lambda i: (0, 0)),        # resident
        ],
        out_specs=pl.BlockSpec((tb, NUM_S), lambda i: (i, 0)),
        compiler_params=pltpu.CompilerParams(
            dimension_semantics=("parallel",)),     # megacore on v7x
    )(x, w1_t, w2_t, w4_t)
    return out[:B]


fc_forward_jit = jax.jit(fc_forward, static_argnames=("stream_dtype", "tile_b"))


def init_params(key):
    """Deterministic synthetic init (shapes match torch.nn.Linear: (out, in))."""
    k1, k2, k3, k4 = jax.random.split(key, 4)

    def uniform(k, shape, fan_in):
        bound = 1.0 / jnp.sqrt(fan_in)
        return jax.random.uniform(k, shape, jnp.float32, -bound, bound)

    return {
        "w1": uniform(k1, (H_CHANNELS, IN_FEATURES), IN_FEATURES),
        "w2": uniform(k2, (H_CHANNELS, H_CHANNELS), H_CHANNELS),
        "w3": uniform(k3, (H_CHANNELS, H_CHANNELS), H_CHANNELS),  # unused in forward
        "w4": uniform(k4, (NUM_S, H_CHANNELS), H_CHANNELS),
    }


def fc_reference(s_x, r_x, params):
    B = s_x.shape[0]
    s_x = s_x.reshape(B, NUM_S, S_CHANNELS)
    r_x = r_x.reshape(B, NUM_R, R_CHANNELS)
    x = jnp.concatenate([s_x[:, :, -1], r_x[:, 0, -5:]], axis=1).astype(jnp.float32)
    h = _leaky_relu(x @ params["w1"].T)
    h = _leaky_relu(h @ params["w2"].T)
    return h @ params["w4"].T


if __name__ == "__main__":
    key = jax.random.PRNGKey(0)
    k_s, k_r, k_p, k_s2, k_r2 = jax.random.split(key, 5)
    params = init_params(k_p)

    # Small smoke test at module-consistent shapes.
    B = 2
    s_x = jax.random.normal(k_s, (B, NUM_S, S_CHANNELS), jnp.float32)
    r_x = jax.random.normal(k_r, (B, NUM_R, R_CHANNELS), jnp.float32)
    out = jax.block_until_ready(fc_forward_jit(s_x, r_x, params))
    ref = fc_reference(s_x, r_x, params)
    assert out.shape == (B, NUM_S), out.shape
    # Tolerance accounts for the bf16 input stream (accumulation is f32).
    assert jnp.allclose(out, ref, atol=2e-2, rtol=2e-2)

    # Multi-tile path: exercises the batch grid, last-tile padding, and
    # VMEM-resident weights across grid steps.
    B2 = 300
    s_x2 = jax.random.normal(k_s2, (B2, NUM_S, S_CHANNELS), jnp.float32)
    r_x2 = jax.random.normal(k_r2, (B2, NUM_R, R_CHANNELS), jnp.float32)
    out2 = jax.block_until_ready(fc_forward_jit(s_x2, r_x2, params, tile_b=128))
    ref2 = fc_reference(s_x2, r_x2, params)
    assert out2.shape == (B2, NUM_S), out2.shape
    assert jnp.allclose(out2, ref2, atol=2e-2, rtol=2e-2)

    print("KERNEL_OK")
</pallas_src>

<mosaic_0001>
module attributes {stable_mosaic.version = 11 : i64} {
  func.func @fc_kernel(%arg0: i32, %arg1: memref<16x43xbf16, #tpu.memory_space<vmem>>, %arg2: memref<43x16xf32, #tpu.memory_space<vmem>>, %arg3: memref<16x16xf32, #tpu.memory_space<vmem>>, %arg4: memref<16x38xf32, #tpu.memory_space<vmem>>, %arg5: memref<16x38xf32, #tpu.memory_space<vmem>>) attributes {dimension_semantics = [#tpu.dimension_semantics<parallel>], iteration_bounds = array<i64: 1>, scalar_prefetch = 0 : i64, scratch_operands = 0 : i64, tpu.core_type = #tpu.core_type<tc>, window_params = [{transform_indices = @transform_0, window_bounds = array<i64: 16, 43>}, {pipeline_mode = #tpu.pipeline_mode<synchronous>, transform_indices = @transform_1, window_bounds = array<i64: 43, 16>}, {pipeline_mode = #tpu.pipeline_mode<synchronous>, transform_indices = @transform_2, window_bounds = array<i64: 16, 16>}, {pipeline_mode = #tpu.pipeline_mode<synchronous>, transform_indices = @transform_3, window_bounds = array<i64: 16, 38>}, {transform_indices = @transform_4, window_bounds = array<i64: 16, 38>}]} {
    %c0 = arith.constant 0 : index
    %c0_0 = arith.constant 0 : index
    %0 = vector.load %arg1[%c0, %c0_0] : memref<16x43xbf16, #tpu.memory_space<vmem>>, vector<16x43xbf16>
    %1 = arith.extf %0 : vector<16x43xbf16> to vector<16x43xf32>
    %c0_1 = arith.constant 0 : index
    %c0_2 = arith.constant 0 : index
    %2 = vector.load %arg2[%c0_1, %c0_2] : memref<43x16xf32, #tpu.memory_space<vmem>>, vector<43x16xf32>
    %cst = arith.constant dense<0.000000e+00> : vector<16x16xf32>
    %3 = tpu.matmul %1, %2, %cst {dimension_numbers = #tpu.dot_dimension_numbers<[1], [0], [0], [1], [0, 0, 1, 1], [], []>} : vector<16x43xf32>, vector<43x16xf32>, vector<16x16xf32> -> vector<16x16xf32>
    %cst_3 = arith.constant 0.000000e+00 : f32
    %4 = vector.broadcast %cst_3 : f32 to vector<16x16xf32>
    %5 = arith.cmpf ogt, %3, %4 : vector<16x16xf32>
    %cst_4 = arith.constant 1.000000e-01 : f32
    %6 = vector.broadcast %cst_4 : f32 to vector<16x16xf32>
    %7 = arith.mulf %6, %3 : vector<16x16xf32>
    %8 = arith.select %5, %3, %7 : vector<16x16xi1>, vector<16x16xf32>
    %c0_5 = arith.constant 0 : index
    %c0_6 = arith.constant 0 : index
    %9 = vector.load %arg3[%c0_5, %c0_6] : memref<16x16xf32, #tpu.memory_space<vmem>>, vector<16x16xf32>
    %cst_7 = arith.constant dense<0.000000e+00> : vector<16x16xf32>
    %10 = tpu.matmul %8, %9, %cst_7 {dimension_numbers = #tpu.dot_dimension_numbers<[1], [0], [0], [1], [0, 0, 1, 1], [], []>} : vector<16x16xf32>, vector<16x16xf32>, vector<16x16xf32> -> vector<16x16xf32>
    %cst_8 = arith.constant 0.000000e+00 : f32
    %11 = vector.broadcast %cst_8 : f32 to vector<16x16xf32>
    %12 = arith.cmpf ogt, %10, %11 : vector<16x16xf32>
    %cst_9 = arith.constant 1.000000e-01 : f32
    %13 = vector.broadcast %cst_9 : f32 to vector<16x16xf32>
    %14 = arith.mulf %13, %10 : vector<16x16xf32>
    %15 = arith.select %12, %10, %14 : vector<16x16xi1>, vector<16x16xf32>
    %c0_10 = arith.constant 0 : index
    %c0_11 = arith.constant 0 : index
    %16 = vector.load %arg4[%c0_10, %c0_11] : memref<16x38xf32, #tpu.memory_space<vmem>>, vector<16x38xf32>
    %cst_12 = arith.constant dense<0.000000e+00> : vector<16x38xf32>
    %17 = tpu.matmul %15, %16, %cst_12 {dimension_numbers = #tpu.dot_dimension_numbers<[1], [0], [0], [1], [0, 0, 1, 1], [], []>} : vector<16x16xf32>, vector<16x38xf32>, vector<16x38xf32> -> vector<16x38xf32>
    %c0_13 = arith.constant 0 : index
    %c0_14 = arith.constant 0 : index
    %18 = vector.load %arg5[%c0_13, %c0_14] : memref<16x38xf32, #tpu.memory_space<vmem>>, vector<16x38xf32>
    tpu.vector_store %arg5[%c0_13, %c0_14], %17 {strides = array<i32>} : memref<16x38xf32, #tpu.memory_space<vmem>>, vector<16x38xf32>,
    return
  }
  func.func @transform_0(%arg0: i32) -> (i32, i32) {
    %c0_i32 = arith.constant 0 : i32
    %c0_i32_0 = arith.constant 0 : i32
    return %arg0, %c0_i32 : i32, i32
  }
  func.func @transform_1(%arg0: i32) -> (i32, i32) {
    %c0_i32 = arith.constant 0 : i32
    %c0_i32_0 = arith.constant 0 : i32
    %c0_i32_1 = arith.constant 0 : i32
    return %c0_i32, %c0_i32_0 : i32, i32
  }
  func.func @transform_2(%arg0: i32) -> (i32, i32) {
    %c0_i32 = arith.constant 0 : i32
    %c0_i32_0 = arith.constant 0 : i32
    %c0_i32_1 = arith.constant 0 : i32
    return %c0_i32, %c0_i32_0 : i32, i32
  }
  func.func @transform_3(%arg0: i32) -> (i32, i32) {
    %c0_i32 = arith.constant 0 : i32
    %c0_i32_0 = arith.constant 0 : i32
    %c0_i32_1 = arith.constant 0 : i32
    return %c0_i32, %c0_i32_0 : i32, i32
  }
  func.func @transform_4(%arg0: i32) -> (i32, i32) {
    %c0_i32 = arith.constant 0 : i32
    %c0_i32_0 = arith.constant 0 : i32
    return %arg0, %c0_i32 : i32, i32
  }
}

</mosaic_0001>

<llo_original>
// kernel: fc_forward.1
$region0: #{fc_forward.1}
  #allocation0 [shape = 'u32[]', space=smem, size = 0x4, offset = 0x4, fixed_abs, tag = 'smem constant byte address 0x4 - core index']
  #allocation1 [shape = 'u32[144,128]{1,0:T(1,128)}', space=vmem, size = 0x12000, scoped, tag = 'internal scratch']
  %s0 = inlined_call_operand.vmem [shape: bf16[16,43], index: 0, kind: input, shape index: {}]
  %s1 = inlined_call_operand.vmem [shape: f32[43,16], index: 1, kind: input, shape index: {}]
  %s2 = inlined_call_operand.vmem [shape: f32[16,16], index: 2, kind: input, shape index: {}]
  %s3 = inlined_call_operand.vmem [shape: f32[16,38], index: 3, kind: input, shape index: {}]
  %s4 = inlined_call_operand.vmem [shape: f32[16,38], index: 4, kind: output, shape index: {}]
  %s5 = sld [smem:[#allocation0]]
  $region26: #{fc_forward.1} parent=0
    _
  %s7 = ssub.s32 1, %s5
  %s8 = scalar_select 0, %s7, %s5
  // Predicated region
  $region2: #{fc_forward.1} parent=0 // pred_check
    _
  $region3: #{fc_forward.1} parent=0 // pred_check_branch
    %10 = sbr.rel (0) target = $region5
  $region4: #{fc_forward.1} parent=0 // pred_region
    _
  $region5: #{fc_forward.1} parent=0 // pred_fallthru
    _
  // Predicated region
  $region6: #{fc_forward.1} parent=0 // pred_check
    _
  $region7: #{fc_forward.1} parent=0 // pred_check_branch
    %12 = sbr.rel (0) target = $region9
  $region8: #{fc_forward.1} parent=0 // pred_region
    _
  $region9: #{fc_forward.1} parent=0 // pred_fallthru
    _
  // Predicated region
  $region10: #{fc_forward.1} parent=0 // pred_check
    _
  $region11: #{fc_forward.1} parent=0 // pred_check_branch
    %14 = sbr.rel (0) target = $region13
  $region12: #{fc_forward.1} parent=0 // pred_region
    _
  $region13: #{fc_forward.1} parent=0 // pred_fallthru
    _
  // Predicated region
  $region14: #{fc_forward.1} parent=0 // pred_check
    _
  $region15: #{fc_forward.1} parent=0 // pred_check_branch
    %16 = sbr.rel (0) target = $region17
  $region16: #{fc_forward.1} parent=0 // pred_region
    _
  $region17: #{fc_forward.1} parent=0 // pred_fallthru
    _
  %v17 = vld [vmem:[%s0] sm:$0xf]
  %v18 = vld [vmem:[%s0 + $0x4] sm:$0xf]
  %v19 = vunpack.c.l.bf16 %v17
  %v20 = vunpack.c.l.bf16 %v18
  %v21 = vld [vmem:[%s1] sm:$0xff]
  %v22 = vld [vmem:[%s1 + $0x8] sm:$0xff]
  %v23 = vld [vmem:[%s1 + $0x10] sm:$0xff]
  %v24 = vld [vmem:[%s1 + $0x18] sm:$0xff]
  %v25 = vld [vmem:[%s1 + $0x20] sm:$0xff]
  %v26 = vld [vmem:[%s1 + $0x28] sm:$0x7]
  %vm27 = vcmask 351232
  %v29 = vsel %vm27, %v19, 0
  %v32 = vsel %vm27, %v20, 0
  %vm34 = vcmask 1042432
  %v36 = vsel %vm34, %v26, 0
  %38 = vmatprep.subr.mxu0 0.0
  %39 = vmatpush1.msra.mxu0 %v21
  %40 = vmatprep.subr.mxu0 0.0
  %41 = vmatpush1.msra.mxu0 %v22
  %42 = vmatprep.subr.mxu0 0.0
  %43 = vmatpush1.msra.mxu0 %v23
  %44 = vmatprep.subr.mxu0 0.0
  %45 = vmatpush1.msra.mxu0 %v24
  %46 = vmatprep.subr.mxu0 0.0
  %47 = vmatpush1.msra.mxu0 %v25
  %48 = vmatprep.subr.mxu0 0.0
  %49 = vmatpush1.msra.mxu0 %v36
  %50 = vmatprep.subr.mxu0 0.0
  %51 = vmatpush1.msra.mxu0 0.0
  %52 = vmatprep.subr.mxu0 0.0
  %53 = vmatpush1.msra.mxu0 0.0
  %54 = vmatprep.subr.mxu0 0.0
  %55 = vmatpush1.msra.mxu0 0.0
  %56 = vmatprep.subr.mxu0 0.0
  %57 = vmatpush1.msra.mxu0 0.0
  %58 = vmatprep.subr.mxu0 0.0
  %59 = vmatpush1.msra.mxu0 0.0
  %60 = vmatprep.subr.mxu0 0.0
  %61 = vmatpush1.msra.mxu0 0.0
  %62 = vmatprep.subr.mxu0 0.0
  %63 = vmatpush1.msra.mxu0 0.0
  %64 = vmatprep.subr.mxu0 0.0
  %65 = vmatpush1.msra.mxu0 0.0
  %66 = vmatprep.subr.mxu0 0.0
  %67 = vmatpush1.msra.mxu0 0.0
  %68 = vmatprep.subr.mxu0 0.0
  %69 = vmatpush1.msra.mxu0 0.0
  %70 = vmatprep.subr.mxu0 0.0
  %71 = vmatpush1.msra.mxu0 0.0
  %72 = vmatprep.subr.mxu0 0.0
  %73 = vmatpush1.msra.mxu0 0.0
  %74 = vmatprep.subr.mxu0 0.0
  %75 = vmatpush1.msra.mxu0 0.0
  %76 = vmatprep.subr.mxu0 0.0
  %77 = vmatpush1.msra.mxu0 0.0
  %78 = vmatprep.subr.mxu0 0.0
  %79 = vmatpush1.msra.mxu0 0.0
  %80 = vmatprep.subr.mxu0 0.0
  %81 = vmatpush1.msra.mxu0 0.0
  %82 = vmatprep.subr.mxu0 0.0
  %83 = vmatpush1.msra.mxu0 0.0
  %84 = vmatprep.subr.mxu0 0.0
  %85 = vmatpush1.msra.mxu0 0.0
  %86 = vmatprep.subr.mxu0 0.0
  %87 = vmatpush1.msra.mxu0 0.0
  %88 = vmatprep.subr.mxu0 0.0
  %89 = vmatpush1.msra.mxu0 0.0
  %90 = vmatprep.subr.mxu0 0.0
  %91 = vmatpush1.msra.mxu0 0.0
  %92 = vmatprep.subr.mxu0 0.0
  %93 = vmatpush1.msra.mxu0 0.0
  %94 = vmatprep.subr.mxu0 0.0
  %95 = vmatpush1.msra.mxu0 0.0
  %96 = vmatprep.subr.mxu0 0.0
  %97 = vmatpush1.msra.mxu0 0.0
  %98 = vmatprep.subr.mxu0 0.0
  %99 = vmatpush1.msra.mxu0 0.0
  %100 = vmatprep.subr.mxu0 0.0
  %101 = vmatpush1.msra.mxu0 0.0
  %102 = vmatprep.mubr.f32.mxu0 0.0
  %103 = vmatmul.mubr.f32.gmra.mrb[0].mxu0 %v29
  %v104 = vpop.f32.mrb[0].mxu0
  %v105 = vadd.f32 0.0, %v104
  %v106 = vpop.f32.mrb[0].mxu0
  %107 = vmatprep.mubr.f32.mxu0 0.0
  %108 = vmatmul.mubr.f32.gmra.mrb[0].mxu0 %v32
  %v109 = vpop.f32.mrb[0].mxu0
  %v110 = vadd.f32 0.0, %v109
  %v111 = vpop.f32.mrb[0].mxu0
  %112 = vdwg.mxu0
  %vm113 = vcmp.gt.f32.partialorder %v105, 0.0
  %vm114 = vcmp.gt.f32.partialorder %v110, 0.0
  %v115 = vmul.f32 %v105, 0.1
  %v116 = vmul.f32 %v110, 0.1
  %v117 = vsel %vm113, %v105, %v115
  %v118 = vsel %vm114, %v110, %v116
  %v119 = vld [vmem:[%s2] sm:$0xff]
  %v120 = vld [vmem:[%s2 + $0x8] sm:$0xff]
  %vm121 = vcmask 130048
  %v123 = vsel %vm121, %v117, 0
  %v126 = vsel %vm121, %v118, 0
  %128 = vmatprep.subr.mxu0 0.0
  %129 = vmatpush1.msra.mxu0 %v119
  %130 = vmatprep.subr.mxu0 0.0
  %131 = vmatpush1.msra.mxu0 %v120
  %132 = vmatprep.subr.mxu0 0.0
  %133 = vmatpush1.msra.mxu0 0.0
  %134 = vmatprep.subr.mxu0 0.0
  %135 = vmatpush1.msra.mxu0 0.0
  %136 = vmatprep.subr.mxu0 0.0
  %137 = vmatpush1.msra.mxu0 0.0
  %138 = vmatprep.subr.mxu0 0.0
  %139 = vmatpush1.msra.mxu0 0.0
  %140 = vmatprep.subr.mxu0 0.0
  %141 = vmatpush1.msra.mxu0 0.0
  %142 = vmatprep.subr.mxu0 0.0
  %143 = vmatpush1.msra.mxu0 0.0
  %144 = vmatprep.subr.mxu0 0.0
  %145 = vmatpush1.msra.mxu0 0.0
  %146 = vmatprep.subr.mxu0 0.0
  %147 = vmatpush1.msra.mxu0 0.0
  %148 = vmatprep.subr.mxu0 0.0
  %149 = vmatpush1.msra.mxu0 0.0
  %150 = vmatprep.subr.mxu0 0.0
  %151 = vmatpush1.msra.mxu0 0.0
  %152 = vmatprep.subr.mxu0 0.0
  %153 = vmatpush1.msra.mxu0 0.0
  %154 = vmatprep.subr.mxu0 0.0
  %155 = vmatpush1.msra.mxu0 0.0
  %156 = vmatprep.subr.mxu0 0.0
  %157 = vmatpush1.msra.mxu0 0.0
  %158 = vmatprep.subr.mxu0 0.0
  %159 = vmatpush1.msra.mxu0 0.0
  %160 = vmatprep.subr.mxu0 0.0
  %161 = vmatpush1.msra.mxu0 0.0
  %162 = vmatprep.subr.mxu0 0.0
  %163 = vmatpush1.msra.mxu0 0.0
  %164 = vmatprep.subr.mxu0 0.0
  %165 = vmatpush1.msra.mxu0 0.0
  %166 = vmatprep.subr.mxu0 0.0
  %167 = vmatpush1.msra.mxu0 0.0
  %168 = vmatprep.subr.mxu0 0.0
  %169 = vmatpush1.msra.mxu0 0.0
  %170 = vmatprep.subr.mxu0 0.0
  %171 = vmatpush1.msra.mxu0 0.0
  %172 = vmatprep.subr.mxu0 0.0
  %173 = vmatpush1.msra.mxu0 0.0
  %174 = vmatprep.subr.mxu0 0.0
  %175 = vmatpush1.msra.mxu0 0.0
  %176 = vmatprep.subr.mxu0 0.0
  %177 = vmatpush1.msra.mxu0 0.0
  %178 = vmatprep.subr.mxu0 0.0
  %179 = vmatpush1.msra.mxu0 0.0
  %180 = vmatprep.subr.mxu0 0.0
  %181 = vmatpush1.msra.mxu0 0.0
  %182 = vmatprep.subr.mxu0 0.0
  %183 = vmatpush1.msra.mxu0 0.0
  %184 = vmatprep.subr.mxu0 0.0
  %185 = vmatpush1.msra.mxu0 0.0
  %186 = vmatprep.subr.mxu0 0.0
  %187 = vmatpush1.msra.mxu0 0.0
  %188 = vmatprep.subr.mxu0 0.0
  %189 = vmatpush1.msra.mxu0 0.0
  %190 = vmatprep.subr.mxu0 0.0
  %191 = vmatpush1.msra.mxu0 0.0
  %192 = vmatprep.mubr.f32.mxu0 0.0
  %193 = vmatmul.mubr.f32.gmra.mrb[0].mxu0 %v123
  %v194 = vpop.f32.mrb[0].mxu0
  %v195 = vadd.f32 0.0, %v194
  %v196 = vpop.f32.mrb[0].mxu0
  %197 = vmatprep.mubr.f32.mxu0 0.0
  %198 = vmatmul.mubr.f32.gmra.mrb[0].mxu0 %v126
  %v199 = vpop.f32.mrb[0].mxu0
  %v200 = vadd.f32 0.0, %v199
  %v201 = vpop.f32.mrb[0].mxu0
  %202 = vdwg.mxu0
  %vm203 = vcmp.gt.f32.partialorder %v195, 0.0
  %vm204 = vcmp.gt.f32.partialorder %v200, 0.0
  %v205 = vmul.f32 %v195, 0.1
  %v206 = vmul.f32 %v200, 0.1
  %v207 = vsel %vm203, %v195, %v205
  %v208 = vsel %vm204, %v200, %v206
  %v209 = vld [vmem:[%s3] sm:$0xff]
  %v210 = vld [vmem:[%s3 + $0x8] sm:$0xff]
  %v212 = vsel %vm121, %v207, 0
  %v215 = vsel %vm121, %v208, 0
  %217 = vmatprep.subr.mxu0 0.0
  %218 = vmatpush1.msra.mxu0 %v209
  %219 = vmatprep.subr.mxu0 0.0
  %220 = vmatpush1.msra.mxu0 %v210
  %221 = vmatprep.subr.mxu0 0.0
  %222 = vmatpush1.msra.mxu0 0.0
  %223 = vmatprep.subr.mxu0 0.0
  %224 = vmatpush1.msra.mxu0 0.0
  %225 = vmatprep.subr.mxu0 0.0
  %226 = vmatpush1.msra.mxu0 0.0
  %227 = vmatprep.subr.mxu0 0.0
  %228 = vmatpush1.msra.mxu0 0.0
  %229 = vmatprep.subr.mxu0 0.0
  %230 = vmatpush1.msra.mxu0 0.0
  %231 = vmatprep.subr.mxu0 0.0
  %232 = vmatpush1.msra.mxu0 0.0
  %233 = vmatprep.subr.mxu0 0.0
  %234 = vmatpush1.msra.mxu0 0.0
  %235 = vmatprep.subr.mxu0 0.0
  %236 = vmatpush1.msra.mxu0 0.0
  %237 = vmatprep.subr.mxu0 0.0
  %238 = vmatpush1.msra.mxu0 0.0
  %239 = vmatprep.subr.mxu0 0.0
  %240 = vmatpush1.msra.mxu0 0.0
  %241 = vmatprep.subr.mxu0 0.0
  %242 = vmatpush1.msra.mxu0 0.0
  %243 = vmatprep.subr.mxu0 0.0
  %244 = vmatpush1.msra.mxu0 0.0
  %245 = vmatprep.subr.mxu0 0.0
  %246 = vmatpush1.msra.mxu0 0.0
  %247 = vmatprep.subr.mxu0 0.0
  %248 = vmatpush1.msra.mxu0 0.0
  %249 = vmatprep.subr.mxu0 0.0
  %250 = vmatpush1.msra.mxu0 0.0
  %251 = vmatprep.subr.mxu0 0.0
  %252 = vmatpush1.msra.mxu0 0.0
  %253 = vmatprep.subr.mxu0 0.0
  %254 = vmatpush1.msra.mxu0 0.0
  %255 = vmatprep.subr.mxu0 0.0
  %256 = vmatpush1.msra.mxu0 0.0
  %257 = vmatprep.subr.mxu0 0.0
  %258 = vmatpush1.msra.mxu0 0.0
  %259 = vmatprep.subr.mxu0 0.0
  %260 = vmatpush1.msra.mxu0 0.0
  %261 = vmatprep.subr.mxu0 0.0
  %262 = vmatpush1.msra.mxu0 0.0
  %263 = vmatprep.subr.mxu0 0.0
  %264 = vmatpush1.msra.mxu0 0.0
  %265 = vmatprep.subr.mxu0 0.0
  %266 = vmatpush1.msra.mxu0 0.0
  %267 = vmatprep.subr.mxu0 0.0
  %268 = vmatpush1.msra.mxu0 0.0
  %269 = vmatprep.subr.mxu0 0.0
  %270 = vmatpush1.msra.mxu0 0.0
  %271 = vmatprep.subr.mxu0 0.0
  %272 = vmatpush1.msra.mxu0 0.0
  %273 = vmatprep.subr.mxu0 0.0
  %274 = vmatpush1.msra.mxu0 0.0
  %275 = vmatprep.subr.mxu0 0.0
  %276 = vmatpush1.msra.mxu0 0.0
  %277 = vmatprep.subr.mxu0 0.0
  %278 = vmatpush1.msra.mxu0 0.0
  %279 = vmatprep.subr.mxu0 0.0
  %280 = vmatpush1.msra.mxu0 0.0
  %281 = vmatprep.mubr.f32.mxu0 0.0
  %282 = vmatmul.mubr.f32.gmra.mrb[0].mxu0 %v212
  %v283 = vpop.f32.mrb[0].mxu0
  %v284 = vadd.f32 0.0, %v283
  %v285 = vpop.f32.mrb[0].mxu0
  %286 = vmatprep.mubr.f32.mxu0 0.0
  %287 = vmatmul.mubr.f32.gmra.mrb[0].mxu0 %v215
  %v288 = vpop.f32.mrb[0].mxu0
  %v289 = vadd.f32 0.0, %v288
  %v290 = vpop.f32.mrb[0].mxu0
  %291 = vdwg.mxu0
  %vm292 = vcmask 310272
  %293 = vst.msk [vmem:[%s4] sm:$0xff] %vm292, %v284
  %294 = vst.msk [vmem:[%s4 + $0x8] sm:$0xff] %vm292, %v289
  // Predicated region
  $region18: #{fc_forward.1} parent=0 // pred_check
    _
  $region19: #{fc_forward.1} parent=0 // pred_check_branch
    %296 = sbr.rel (0) target = $region21
  $region20: #{fc_forward.1} parent=0 // pred_region
    _
  $region21: #{fc_forward.1} parent=0 // pred_fallthru
    _
  // Predicated region
  $region22: #{fc_forward.1} parent=0 // pred_check
    _
  $region23: #{fc_forward.1} parent=0 // pred_check_branch
    %298 = sbr.rel (0) target = $region25
  $region24: #{fc_forward.1} parent=0 // pred_region
    _
  $region25: #{fc_forward.1} parent=0 // pred_fallthru
    _

</llo_original>
